<compile_context>
chip_gen: v6e
topology: v6e:2x2x1
jax: 0.10.0
libtpu: 0.0.40
codegen_flags: <defaults>
</compile_context>

<pallas_src>
import jax
import jax.numpy as jnp
from jax import lax
from jax.experimental import pallas as pl
from jax.experimental.pallas import tpu as pltpu


# ----------------------------------------------------------------------------
# Kernel: one-hot MXU gather of user+item rows from the stacked table,
# emitted as a lane-dense packed (TB, 2*D) block.
# ----------------------------------------------------------------------------
def _ncf_gather_kernel(idx_ref, tbl_ref, emb_ref):
    # idx_ref: (TB, 2) int32  — col 0 = user row, col 1 = item row (already
    #                           offset by user_num into the stacked table).
    # tbl_ref: (Nu+Ni, D) f32 — stacked [user ; item] embedding tables,
    #                           VMEM-resident across all grid steps.
    # emb_ref: (TB, 2*D) f32  — packed [uembd | iembd], 2*D == 128 lane-dense.
    tb = emb_ref.shape[0]
    n_rows = tbl_ref.shape[0]

    idx = idx_ref[...]                                              # (TB, 2)
    iota = lax.broadcasted_iota(jnp.int32, (tb, n_rows), 1)         # (TB, N)
    onehot_u = (iota == idx[:, 0:1]).astype(jnp.float32)            # (TB, N)
    onehot_i = (iota == idx[:, 1:2]).astype(jnp.float32)            # (TB, N)

    tbl = tbl_ref[...]                                              # (N, D)
    # Exact gather: 1.0 * row + 0.0 * rest on the MXU is bit-exact.
    u_g = jnp.dot(onehot_u, tbl, preferred_element_type=jnp.float32)  # (TB, D)
    i_g = jnp.dot(onehot_i, tbl, preferred_element_type=jnp.float32)  # (TB, D)

    # One full-width unmasked store (last dim = 128).
    emb_ref[...] = jnp.concatenate([u_g, i_g], axis=1)


# ----------------------------------------------------------------------------
# Parameter preparation (done once, outside the jitted forward): stack the two
# embedding tables into one lane-dense slab and record the item-row offset.
# ----------------------------------------------------------------------------
def pack_params(params):
    return {
        "embd_tbl": jnp.concatenate([params["u_embd"], params["i_embd"]],
                                    axis=0),                       # (Nu+Ni, D)
        "user_num": jnp.int32(params["u_embd"].shape[0]),
    }


# ----------------------------------------------------------------------------
# Full NCF forward: matches the PyTorch module's return value (uembd, iembd).
# The fc_layers MLP and finalLayer are dead code in the reference forward and
# are therefore not executed.
# ----------------------------------------------------------------------------
def ncf_forward(packed, user_idx, item_idx):
    tbl = packed["embd_tbl"]
    n_rows, D = tbl.shape
    B = user_idx.shape[0]
    assert (2 * D) % 128 == 0, "packed output must stay lane-dense (2*D % 128 == 0)"

    # One consolidated (B, 2) int32 index array (item rows offset into the
    # stacked table).
    idx = jnp.stack(
        [user_idx.astype(jnp.int32),
         item_idx.astype(jnp.int32) + packed["user_num"]], axis=1)   # (B, 2)

    # Batch tile: 256 fills the v6e/v7x MXU (and is a multiple of 128 for
    # v5e); small batches run as a single grid step.
    tb = B if B <= 256 else 256
    assert B % tb == 0, "batch must be a multiple of the batch tile"
    grid = (B // tb,)

    packed_out = pl.pallas_call(
        _ncf_gather_kernel,
        out_shape=jax.ShapeDtypeStruct((B, 2 * D), jnp.float32),
        grid_spec=pltpu.PrefetchScalarGridSpec(
            num_scalar_prefetch=0,
            grid=grid,
            in_specs=[
                # Streaming per-tile index block.
                pl.BlockSpec((tb, 2), lambda i: (i, 0)),
                # Stacked table: constant index_map -> fetched once, resident.
                pl.BlockSpec((n_rows, D), lambda i: (0, 0)),
            ],
            out_specs=pl.BlockSpec((tb, 2 * D), lambda i: (i, 0)),
        ),
        compiler_params=pltpu.CompilerParams(
            dimension_semantics=("parallel",)),   # shards across v7x's 2 TCs
    )(idx, tbl)

    uembd = packed_out[:, :D]      # zero-cost slices of the lane-dense output
    iembd = packed_out[:, D:]
    return uembd, iembd


# ----------------------------------------------------------------------------
# Parameter init (mirrors the module's __init__; fc_layers / finalLayer params
# are created for parity but unused by the forward, exactly like the spec).
# ----------------------------------------------------------------------------
def init_params(key, user_num, item_num, dim, layers=(128, 64, 32, 8)):
    assert 2 * dim == layers[0], "cat([uembd, iembd]) width must equal layers[0]"
    ks = jax.random.split(key, 10)
    p = {
        "u_embd": jax.random.normal(ks[0], (user_num, dim), jnp.float32) * 0.1,
        "i_embd": jax.random.normal(ks[1], (item_num, dim), jnp.float32) * 0.1,
    }
    names = ["1", "2", "3"]
    for n, (f, t), k_w, k_b in zip(names, zip(layers[:-1], layers[1:]),
                                   ks[2:5], ks[5:8]):
        p["w" + n] = jax.random.normal(k_w, (f, t), jnp.float32) * (1.0 / f) ** 0.5
        p["b" + n] = jax.random.normal(k_b, (1, t), jnp.float32) * 0.01
    p["w_final"] = jax.random.normal(ks[8], (layers[-1], 1), jnp.float32) * 0.1
    p["b_final"] = jax.random.normal(ks[9], (1, 1), jnp.float32) * 0.01
    return p


if __name__ == "__main__":
    key = jax.random.PRNGKey(0)
    USER_NUM, ITEM_NUM, DIM, BATCH = 10, 12, 64, 8

    k_p, k_u, k_i = jax.random.split(key, 3)
    params = init_params(k_p, USER_NUM, ITEM_NUM, DIM)
    packed = pack_params(params)   # one-time parameter prep (hoisted out of jit)

    user_idx = jax.random.randint(k_u, (BATCH,), 0, USER_NUM, dtype=jnp.int32)
    item_idx = jax.random.randint(k_i, (BATCH,), 0, ITEM_NUM, dtype=jnp.int32)

    fwd = jax.jit(ncf_forward)
    uembd, iembd = fwd(packed, user_idx, item_idx)
    jax.block_until_ready((uembd, iembd))

    # --- Sanity checks against plain-JAX reference (bit-exact gather). ---
    ref_u = params["u_embd"][user_idx]
    ref_i = params["i_embd"][item_idx]
    assert uembd.shape == (BATCH, DIM) and iembd.shape == (BATCH, DIM)
    assert jnp.array_equal(uembd, ref_u), "user embedding mismatch"
    assert jnp.array_equal(iembd, ref_i), "item embedding mismatch"

    print("KERNEL_OK")
</pallas_src>

<mosaic_0001>
module attributes {stable_mosaic.version = 11 : i64} {
  func.func @_ncf_gather_kernel(%arg0: i32, %arg1: memref<8x2xi32, #tpu.memory_space<vmem>>, %arg2: memref<22x64xf32, #tpu.memory_space<vmem>>, %arg3: memref<8x128xf32, #tpu.memory_space<vmem>>) attributes {dimension_semantics = [#tpu.dimension_semantics<parallel>], iteration_bounds = array<i64: 1>, scalar_prefetch = 0 : i64, scratch_operands = 0 : i64, tpu.core_type = #tpu.core_type<tc>, window_params = [{transform_indices = @transform_0, window_bounds = array<i64: 8, 2>}, {pipeline_mode = #tpu.pipeline_mode<synchronous>, transform_indices = @transform_1, window_bounds = array<i64: 22, 64>}, {transform_indices = @transform_2, window_bounds = array<i64: 8, 128>}]} {
    %c0 = arith.constant 0 : index
    %c0_0 = arith.constant 0 : index
    %0 = vector.load %arg1[%c0, %c0_0] : memref<8x2xi32, #tpu.memory_space<vmem>>, vector<8x2xi32>
    %1 = tpu.iota {dimensions = array<i32: 1>} : vector<8x22xi32>
    %2 = vector.extract_strided_slice %0 {offsets = [0, 0], sizes = [8, 1], strides = [1, 1]} : vector<8x2xi32> to vector<8x1xi32>
    %3 = vector.broadcast %2 : vector<8x1xi32> to vector<8x22xi32>
    %4 = arith.cmpi eq, %1, %3 : vector<8x22xi32>
    %5 = arith.extui %4 : vector<8x22xi1> to vector<8x22xi32>
    %6 = arith.sitofp %5 : vector<8x22xi32> to vector<8x22xf32>
    %7 = vector.extract_strided_slice %0 {offsets = [0, 1], sizes = [8, 1], strides = [1, 1]} : vector<8x2xi32> to vector<8x1xi32>
    %8 = vector.broadcast %7 : vector<8x1xi32> to vector<8x22xi32>
    %9 = arith.cmpi eq, %1, %8 : vector<8x22xi32>
    %10 = arith.extui %9 : vector<8x22xi1> to vector<8x22xi32>
    %11 = arith.sitofp %10 : vector<8x22xi32> to vector<8x22xf32>
    %c0_1 = arith.constant 0 : index
    %c0_2 = arith.constant 0 : index
    %12 = vector.load %arg2[%c0_1, %c0_2] : memref<22x64xf32, #tpu.memory_space<vmem>>, vector<22x64xf32>
    %cst = arith.constant dense<0.000000e+00> : vector<8x64xf32>
    %13 = tpu.matmul %6, %12, %cst {dimension_numbers = #tpu.dot_dimension_numbers<[1], [0], [0], [1], [0, 0, 1, 1], [], []>} : vector<8x22xf32>, vector<22x64xf32>, vector<8x64xf32> -> vector<8x64xf32>
    %cst_3 = arith.constant dense<0.000000e+00> : vector<8x64xf32>
    %14 = tpu.matmul %11, %12, %cst_3 {dimension_numbers = #tpu.dot_dimension_numbers<[1], [0], [0], [1], [0, 0, 1, 1], [], []>} : vector<8x22xf32>, vector<22x64xf32>, vector<8x64xf32> -> vector<8x64xf32>
    %15 = tpu.concatenate %13, %14 in 1 : vector<8x64xf32>, vector<8x64xf32> -> vector<8x128xf32>
    %c0_4 = arith.constant 0 : index
    %c0_5 = arith.constant 0 : index
    %16 = vector.load %arg3[%c0_4, %c0_5] : memref<8x128xf32, #tpu.memory_space<vmem>>, vector<8x128xf32>
    tpu.vector_store %arg3[%c0_4, %c0_5], %15 {strides = array<i32>} : memref<8x128xf32, #tpu.memory_space<vmem>>, vector<8x128xf32>,
    return
  }
  func.func @transform_0(%arg0: i32) -> (i32, i32) {
    %c0_i32 = arith.constant 0 : i32
    %c0_i32_0 = arith.constant 0 : i32
    return %arg0, %c0_i32 : i32, i32
  }
  func.func @transform_1(%arg0: i32) -> (i32, i32) {
    %c0_i32 = arith.constant 0 : i32
    %c0_i32_0 = arith.constant 0 : i32
    %c0_i32_1 = arith.constant 0 : i32
    return %c0_i32, %c0_i32_0 : i32, i32
  }
  func.func @transform_2(%arg0: i32) -> (i32, i32) {
    %c0_i32 = arith.constant 0 : i32
    %c0_i32_0 = arith.constant 0 : i32
    return %arg0, %c0_i32 : i32, i32
  }
}

</mosaic_0001>

<llo_original>
// kernel: ncf_forward.1
$region0: #{ncf_forward.1}
  #allocation0 [shape = 'u32[]', space=smem, size = 0x4, offset = 0x4, fixed_abs, tag = 'smem constant byte address 0x4 - core index']
  #allocation1 [shape = 'u32[144,128]{1,0:T(1,128)}', space=vmem, size = 0x12000, scoped, tag = 'internal scratch']
  %s0 = inlined_call_operand.vmem [shape: s32[8,2], index: 0, kind: input, shape index: {}]
  %s1 = inlined_call_operand.hbm [shape: f32[22,64], index: 1, kind: input, shape index: {}]
  %s2 = inlined_call_operand.vmem [shape: f32[8,128], index: 2, kind: output, shape index: {}]
  %s3 = sld [smem:[#allocation0]]
  $region22: #{ncf_forward.1} parent=0
    _
  %s5 = ssub.s32 1, %s3
  %s6 = scalar_select 0, %s5, %s3
  $region1: #{ncf_forward.1} parent=0
    #allocation2 [shape = 'u8[12288]{0}', space=vmem, size = 0x3000, scoped, tag = 'input window, operand 1, single buffered']
    #allocation3 [shape = 's32[1]{0}', space=sflag, size = 0x4, scoped, tag = 'scoped memory for ncf_forward.1']
    %7 = vsyncpa [#allocation3], 0
    // Predicated region
    $region2: #{ncf_forward.1} parent=1 // pred_check
      _
    $region3: #{ncf_forward.1} parent=1 // pred_check_branch
      %9 = sbr.rel (0) target = $region5
    $region4: #{ncf_forward.1} parent=1 // pred_region
      _
    $region5: #{ncf_forward.1} parent=1 // pred_fallthru
      _
    // Predicated region
    $region6: #{ncf_forward.1} parent=1 // pred_check
      _
    $region7: #{ncf_forward.1} parent=1 // pred_check_branch
      %11 = sbr.rel (0) target = $region9
    $region8: #{ncf_forward.1} parent=1 // pred_region
      %s13 = ssub.s32 384, 384
      %14 = vsyncadd [#allocation3], %s13
      %s15 = sshll.u32 [#allocation2], 4
      %s16 = int_to_ptr.vmem [resolvable:$true] %s15
      %21 = dma.hbm_to_vmem [thread:$0]  %s1, 384, %s16, [#allocation3], 128, 128, 8
    $region9: #{ncf_forward.1} parent=1 // pred_fallthru
      _
    // Predicated region
    $region10: #{ncf_forward.1} parent=1 // pred_check
      _
    $region11: #{ncf_forward.1} parent=1 // pred_check_branch
      %23 = sbr.rel (0) target = $region13
    $region12: #{ncf_forward.1} parent=1 // pred_region
      %24 = dma.done [#allocation3], 384
    $region13: #{ncf_forward.1} parent=1 // pred_fallthru
      _
    %v25 = vld [vmem:[%s0] sm:$0xff]
    %v26 = vlaneseq
    %v27 = vand.u32 %v26, 127
    %28 = vset.pattern.permute.xlu0 0
    %29 = vperm.xlu0 %28, %v25
    %v30 = vpop.permute.xlu0 %29
    %vm31 = vcmp.eq.s32.totalorder %v27, %v30
    %v32 = vsel %vm31, 1, 0
    %v33 = vcvt.s32.f32 %v32
    %34 = vset.pattern.permute.xlu0 1
    %35 = vperm.xlu0 %34, %v25
    %v36 = vpop.permute.xlu0 %35
    %vm37 = vcmp.eq.s32.totalorder %v27, %v36
    %v38 = vsel %vm37, 1, 0
    %v39 = vcvt.s32.f32 %v38
    %v40 = vld [vmem:[#allocation2] sm:$0xff]
    %v41 = vld [vmem:[#allocation2 + $0x8] sm:$0xff]
    %v42 = vld [vmem:[#allocation2 + $0x10] sm:$0x3f]
    %vm43 = vcmask 179200
    %v45 = vsel %vm43, %v33, 0
    %vm47 = vcmask 1045504
    %v49 = vsel %vm47, %v42, 0
    %51 = vmatprep.subr.mxu0 0.0
    %52 = vmatpush1.msra.mxu0 0.0
    %53 = vmatprep.subr.mxu0 0.0
    %54 = vmatpush1.msra.mxu0 0.0
    %55 = vmatprep.subr.mxu0 0.0
    %56 = vmatpush1.msra.mxu0 0.0
    %57 = vmatprep.subr.mxu0 0.0
    %58 = vmatpush1.msra.mxu0 0.0
    %59 = vmatprep.subr.mxu0 0.0
    %60 = vmatpush1.msra.mxu0 0.0
    %61 = vmatprep.subr.mxu0 0.0
    %62 = vmatpush1.msra.mxu0 0.0
    %63 = vmatprep.subr.mxu0 0.0
    %64 = vmatpush1.msra.mxu0 0.0
    %65 = vmatprep.subr.mxu0 0.0
    %66 = vmatpush1.msra.mxu0 0.0
    %67 = vmatprep.subr.mxu0 0.0
    %68 = vmatpush1.msra.mxu0 0.0
    %69 = vmatprep.subr.mxu0 0.0
    %70 = vmatpush1.msra.mxu0 0.0
    %71 = vmatprep.subr.mxu0 0.0
    %72 = vmatpush1.msra.mxu0 0.0
    %73 = vmatprep.subr.mxu0 0.0
    %74 = vmatpush1.msra.mxu0 0.0
    %75 = vmatprep.subr.mxu0 0.0
    %76 = vmatpush1.msra.mxu0 0.0
    %77 = vmatprep.subr.mxu0 0.0
    %78 = vmatpush1.msra.mxu0 %v49
    %79 = vmatprep.subr.mxu0 0.0
    %80 = vmatpush1.msra.mxu0 %v41
    %81 = vmatprep.subr.mxu0 0.0
    %82 = vmatpush1.msra.mxu0 %v40
    %83 = vmatprep.subr.mxu0 0.0
    %84 = vmatpush2.msra.mxu0 0.0
    %85 = vmatprep.subr.mxu0 0.0
    %86 = vmatpush2.msra.mxu0 0.0
    %87 = vmatprep.subr.mxu0 0.0
    %88 = vmatpush2.msra.mxu0 0.0
    %89 = vmatprep.subr.mxu0 0.0
    %90 = vmatpush2.msra.mxu0 0.0
    %91 = vmatprep.subr.mxu0 0.0
    %92 = vmatpush2.msra.mxu0 0.0
    %93 = vmatprep.subr.mxu0 0.0
    %94 = vmatpush2.msra.mxu0 0.0
    %95 = vmatprep.subr.mxu0 0.0
    %96 = vmatpush2.msra.mxu0 0.0
    %97 = vmatprep.subr.mxu0 0.0
    %98 = vmatpush2.msra.mxu0 0.0
    %99 = vmatprep.subr.mxu0 0.0
    %100 = vmatpush2.msra.mxu0 0.0
    %101 = vmatprep.subr.mxu0 0.0
    %102 = vmatpush2.msra.mxu0 0.0
    %103 = vmatprep.subr.mxu0 0.0
    %104 = vmatpush2.msra.mxu0 0.0
    %105 = vmatprep.subr.mxu0 0.0
    %106 = vmatpush2.msra.mxu0 0.0
    %107 = vmatprep.subr.mxu0 0.0
    %108 = vmatpush2.msra.mxu0 0.0
    %109 = vmatprep.subr.mxu0 0.0
    %110 = vmatpush2.msra.mxu0 0.0
    %111 = vmatprep.subr.mxu0 0.0
    %112 = vmatpush2.msra.mxu0 0.0
    %113 = vmatprep.subr.mxu0 0.0
    %114 = vmatpush2.msra.mxu0 0.0
    %115 = vmatprep.mubr.f32.mxu0 0.0
    %116 = vmatmul.mubr.f32.gmra.mxu0 %v45
    %v117 = vpop.f32.mrf.mxu0
    %v118 = vadd.f32 0.0, %v117
    %v119 = vpop.f32.mrf.mxu0
    %120 = vdwg.mxu0
    %v122 = vsel %vm43, %v39, 0
    %124 = vmatprep.subr.mxu0 0.0
    %125 = vmatpush1.msra.mxu0 0.0
    %126 = vmatprep.subr.mxu0 0.0
    %127 = vmatpush1.msra.mxu0 0.0
    %128 = vmatprep.subr.mxu0 0.0
    %129 = vmatpush1.msra.mxu0 0.0
    %130 = vmatprep.subr.mxu0 0.0
    %131 = vmatpush1.msra.mxu0 0.0
    %132 = vmatprep.subr.mxu0 0.0
    %133 = vmatpush1.msra.mxu0 0.0
    %134 = vmatprep.subr.mxu0 0.0
    %135 = vmatpush1.msra.mxu0 0.0
    %136 = vmatprep.subr.mxu0 0.0
    %137 = vmatpush1.msra.mxu0 0.0
    %138 = vmatprep.subr.mxu0 0.0
    %139 = vmatpush1.msra.mxu0 0.0
    %140 = vmatprep.subr.mxu0 0.0
    %141 = vmatpush1.msra.mxu0 0.0
    %142 = vmatprep.subr.mxu0 0.0
    %143 = vmatpush1.msra.mxu0 0.0
    %144 = vmatprep.subr.mxu0 0.0
    %145 = vmatpush1.msra.mxu0 0.0
    %146 = vmatprep.subr.mxu0 0.0
    %147 = vmatpush1.msra.mxu0 0.0
    %148 = vmatprep.subr.mxu0 0.0
    %149 = vmatpush1.msra.mxu0 0.0
    %150 = vmatprep.subr.mxu0 0.0
    %151 = vmatpush1.msra.mxu0 %v49
    %152 = vmatprep.subr.mxu0 0.0
    %153 = vmatpush1.msra.mxu0 %v41
    %154 = vmatprep.subr.mxu0 0.0
    %155 = vmatpush1.msra.mxu0 %v40
    %156 = vmatprep.subr.mxu0 0.0
    %157 = vmatpush2.msra.mxu0 0.0
    %158 = vmatprep.subr.mxu0 0.0
    %159 = vmatpush2.msra.mxu0 0.0
    %160 = vmatprep.subr.mxu0 0.0
    %161 = vmatpush2.msra.mxu0 0.0
    %162 = vmatprep.subr.mxu0 0.0
    %163 = vmatpush2.msra.mxu0 0.0
    %164 = vmatprep.subr.mxu0 0.0
    %165 = vmatpush2.msra.mxu0 0.0
    %166 = vmatprep.subr.mxu0 0.0
    %167 = vmatpush2.msra.mxu0 0.0
    %168 = vmatprep.subr.mxu0 0.0
    %169 = vmatpush2.msra.mxu0 0.0
    %170 = vmatprep.subr.mxu0 0.0
    %171 = vmatpush2.msra.mxu0 0.0
    %172 = vmatprep.subr.mxu0 0.0
    %173 = vmatpush2.msra.mxu0 0.0
    %174 = vmatprep.subr.mxu0 0.0
    %175 = vmatpush2.msra.mxu0 0.0
    %176 = vmatprep.subr.mxu0 0.0
    %177 = vmatpush2.msra.mxu0 0.0
    %178 = vmatprep.subr.mxu0 0.0
    %179 = vmatpush2.msra.mxu0 0.0
    %180 = vmatprep.subr.mxu0 0.0
    %181 = vmatpush2.msra.mxu0 0.0
    %182 = vmatprep.subr.mxu0 0.0
    %183 = vmatpush2.msra.mxu0 0.0
    %184 = vmatprep.subr.mxu0 0.0
    %185 = vmatpush2.msra.mxu0 0.0
    %186 = vmatprep.subr.mxu0 0.0
    %187 = vmatpush2.msra.mxu0 0.0
    %188 = vmatprep.mubr.f32.mxu0 0.0
    %189 = vmatmul.mubr.f32.gmra.mxu0 %v122
    %v190 = vpop.f32.mrf.mxu0
    %v191 = vadd.f32 0.0, %v190
    %v192 = vpop.f32.mrf.mxu0
    %193 = vdwg.mxu0
    %195 = vrot.lane.b32.xlu0 %v191, 64
    %v196 = vpop.permute.xlu0 %195
    %vm198 = vcmask 523264
    %v199 = vsel %vm198, %v118, %v196
    %200 = vst [vmem:[%s2] sm:$0xff] %v199
    // Predicated region
    $region14: #{ncf_forward.1} parent=1 // pred_check
      _
    $region15: #{ncf_forward.1} parent=1 // pred_check_branch
      %202 = sbr.rel (0) target = $region17
    $region16: #{ncf_forward.1} parent=1 // pred_region
      _
    $region17: #{ncf_forward.1} parent=1 // pred_fallthru
      _
    // Predicated region
    $region18: #{ncf_forward.1} parent=1 // pred_check
      _
    $region19: #{ncf_forward.1} parent=1 // pred_check_branch
      %204 = sbr.rel (0) target = $region21
    $region20: #{ncf_forward.1} parent=1 // pred_region
      _
    $region21: #{ncf_forward.1} parent=1 // pred_fallthru
      _
    %205 = vsyncpa [#allocation3], 1

</llo_original>
